<compile_context>
chip_gen: v7x
topology: tpu7x:2x2x1
jax: 0.10.0
libtpu: 0.0.40
codegen_flags: <defaults>
</compile_context>

<pallas_src>
import jax
import jax.numpy as jnp
from jax.experimental import pallas as pl
from jax.experimental.pallas import tpu as pltpu


def _h_swish_kernel(x_ref, o_ref):
    """Elementwise h_swish on one (tile_rows, lane) VMEM tile."""
    x = x_ref[...].astype(jnp.float32)
    # x * relu6(x + 3) / 6  ==  x * clip(x + 3, 0, 6) * (1/6)
    y = x * (jnp.clip(x + 3.0, 0.0, 6.0) * (1.0 / 6.0))
    o_ref[...] = y.astype(o_ref.dtype)


def _choose_layout(total):
    """Pick a lane-dense 2-D layout (rows, lane) and a row tile size."""
    # Prefer a wide last dim (multiple of 128) for unmasked vector stores.
    lane = 128
    for cand in (2048, 1024, 512, 256, 128):
        if total >= cand * 8:          # at least one full (8, lane) vreg tile
            lane = cand
            break

    rows = pl.cdiv(total, lane)
    rows8 = ((rows + 7) // 8) * 8      # sublane-align the row count

    # Cap per-step tile at ~512K elements (~2 MiB f32 per buffer).  With the
    # default double-buffered input + output this stays far under every
    # chip's scoped-VMEM budget while amortizing the ~0.35 us/step overhead.
    max_tile_rows = max(8, (512 * 1024 // lane) // 8 * 8)
    tile_rows = min(max_tile_rows, rows8)

    rows_padded = pl.cdiv(rows8, tile_rows) * tile_rows
    return lane, rows_padded, tile_rows


def h_swish(x):
    """JAX/Pallas counterpart of models/blocks.py::h_swish.forward."""
    orig_shape = x.shape
    dtype = x.dtype
    total = x.size

    lane, rows, tile_rows = _choose_layout(total)
    padded_total = rows * lane

    # Flatten to a lane-dense 2-D slab; zero padding is safe (h_swish(0)=0).
    flat = x.reshape(-1)
    if padded_total != total:
        flat = jnp.pad(flat, (0, padded_total - total))
    x2d = flat.reshape(rows, lane)

    grid = (rows // tile_rows,)
    out2d = pl.pallas_call(
        _h_swish_kernel,
        out_shape=jax.ShapeDtypeStruct((rows, lane), dtype),
        grid_spec=pltpu.PrefetchScalarGridSpec(
            num_scalar_prefetch=0,
            grid=grid,
            in_specs=[pl.BlockSpec((tile_rows, lane), lambda i: (i, 0))],
            out_specs=pl.BlockSpec((tile_rows, lane), lambda i: (i, 0)),
        ),
        compiler_params=pltpu.CompilerParams(
            dimension_semantics=("parallel",)),
    )(x2d)

    out = out2d.reshape(-1)
    if padded_total != total:
        out = out[:total]
    return out.reshape(orig_shape)


def _reference_h_swish(x):
    """Pure-JAX reference: x * relu6(x + 3) / 6."""
    return x * jnp.clip(x + 3.0, 0.0, 6.0) / 6.0


if __name__ == "__main__":
    key = jax.random.PRNGKey(0)
    # Small NCHW activation consistent with how h_swish is used in the model.
    x = 4.0 * jax.random.normal(key, (2, 4, 16, 16), dtype=jnp.float32)

    out = h_swish(x)
    out = jax.block_until_ready(out)
    ref = _reference_h_swish(x)

    ok = (out.shape == ref.shape and out.dtype == ref.dtype
          and bool(jnp.allclose(out, ref, atol=1e-6, rtol=1e-6)))

    if ok:
        print("KERNEL_OK")
</pallas_src>

<mosaic_0001>
module attributes {stable_mosaic.version = 11 : i64} {
  func.func @_h_swish_kernel(%arg0: i32, %arg1: memref<8x256xf32, #tpu.memory_space<vmem>>, %arg2: memref<8x256xf32, #tpu.memory_space<vmem>>) attributes {dimension_semantics = [#tpu.dimension_semantics<parallel>], iteration_bounds = array<i64: 1>, scalar_prefetch = 0 : i64, scratch_operands = 0 : i64, tpu.core_type = #tpu.core_type<tc>, window_params = [{transform_indices = @transform_0, window_bounds = array<i64: 8, 256>}, {transform_indices = @transform_1, window_bounds = array<i64: 8, 256>}]} {
    %c0 = arith.constant 0 : index
    %c0_0 = arith.constant 0 : index
    %0 = vector.load %arg1[%c0, %c0_0] : memref<8x256xf32, #tpu.memory_space<vmem>>, vector<8x256xf32>
    %cst = arith.constant 3.000000e+00 : f32
    %1 = vector.broadcast %cst : f32 to vector<8x256xf32>
    %2 = arith.addf %0, %1 : vector<8x256xf32>
    %cst_1 = arith.constant 0.000000e+00 : f32
    %cst_2 = arith.constant 6.000000e+00 : f32
    %3 = vector.broadcast %cst_1 : f32 to vector<8x256xf32>
    %4 = arith.maximumf %3, %2 : vector<8x256xf32>
    %5 = vector.broadcast %cst_2 : f32 to vector<8x256xf32>
    %6 = arith.minimumf %5, %4 : vector<8x256xf32>
    %cst_3 = arith.constant 0.166666672 : f32
    %7 = vector.broadcast %cst_3 : f32 to vector<8x256xf32>
    %8 = arith.mulf %6, %7 : vector<8x256xf32>
    %9 = arith.mulf %0, %8 : vector<8x256xf32>
    %c0_4 = arith.constant 0 : index
    %c0_5 = arith.constant 0 : index
    %10 = vector.load %arg2[%c0_4, %c0_5] : memref<8x256xf32, #tpu.memory_space<vmem>>, vector<8x256xf32>
    tpu.vector_store %arg2[%c0_4, %c0_5], %9 {strides = array<i32>} : memref<8x256xf32, #tpu.memory_space<vmem>>, vector<8x256xf32>,
    return
  }
  func.func @transform_0(%arg0: i32) -> (i32, i32) {
    %c0_i32 = arith.constant 0 : i32
    %c0_i32_0 = arith.constant 0 : i32
    return %arg0, %c0_i32 : i32, i32
  }
  func.func @transform_1(%arg0: i32) -> (i32, i32) {
    %c0_i32 = arith.constant 0 : i32
    %c0_i32_0 = arith.constant 0 : i32
    return %arg0, %c0_i32 : i32, i32
  }
}

</mosaic_0001>

<llo_original>
// kernel: tpu_custom_call.1
$region0: #{tpu_custom_call.1}
  #allocation0 [shape = 'u32[]', space=smem, size = 0x4, offset = 0x4, fixed_abs, tag = 'smem constant byte address 0x4 - core index']
  #allocation1 [shape = 'u32[144,128]{1,0:T(1,128)}', space=vmem, size = 0x12000, scoped, tag = 'internal scratch']
  %s0 = inlined_call_operand.hbm [shape: f32[8,256], index: 0, kind: input, shape index: {}]
  %s1 = inlined_call_operand.hbm [shape: f32[8,256], index: 1, kind: output, shape index: {}]
  %s2 = sld [smem:[#allocation0]]
  $region18: #{tpu_custom_call.1} parent=0
    _
  %s4 = ssub.s32 1, %s2
  %s5 = scalar_select 0, %s4, %s2
  $region1: #{tpu_custom_call.1} parent=0
    #allocation2 [shape = 'u8[8192]{0}', space=vmem, size = 0x2000, scoped, tag = 'input window, operand 0, single buffered']
    #allocation3 [shape = 's32[1]{0}', space=sflag, size = 0x4, scoped, tag = 'scoped memory for tpu_custom_call.1']
    #allocation4 [shape = 's32[1]{0}', space=sflag, size = 0x4, scoped, tag = 'scoped memory for tpu_custom_call.1']
    #allocation5 [shape = 'u8[8192]{0}', space=vmem, size = 0x2000, scoped, tag = 'output window, operand 0, single buffered']
    %6 = vsyncpa [#allocation3], 0
    %7 = vsyncpa [#allocation4], 0
    // Predicated region
    $region2: #{tpu_custom_call.1} parent=1 // pred_check
      _
    $region3: #{tpu_custom_call.1} parent=1 // pred_check_branch
      %9 = sbr.rel (0) target = $region5
    $region4: #{tpu_custom_call.1} parent=1 // pred_region
      %s11 = ssub.s32 256, 256
      %12 = vsyncadd [#allocation3], %s11
      %s14 = sshll.u32 [#allocation2], 4
      %s15 = int_to_ptr.vmem [resolvable:$true] %s14
      %17 = dma.hbm_to_vmem [thread:$0]  %s0, 256, %s15, [#allocation3]
    $region5: #{tpu_custom_call.1} parent=1 // pred_fallthru
      _
    // Predicated region
    $region6: #{tpu_custom_call.1} parent=1 // pred_check
      _
    $region7: #{tpu_custom_call.1} parent=1 // pred_check_branch
      %19 = sbr.rel (0) target = $region9
    $region8: #{tpu_custom_call.1} parent=1 // pred_region
      %20 = dma.done [#allocation3], 256
    $region9: #{tpu_custom_call.1} parent=1 // pred_fallthru
      _
    %v21 = vld [vmem:[#allocation2] sm:$0xff]
    %v22 = vld [vmem:[#allocation2 + $0x8] sm:$0xff]
    %v23 = vadd.f32 %v21, 3.0
    %v24 = vadd.f32 %v22, 3.0
    %v25 = vmax.f32 %v23, 0.0
    %v26 = vmax.f32 %v24, 0.0
    %v27 = vmin.f32 %v25, 6.0
    %v28 = vmin.f32 %v26, 6.0
    %v29 = vmul.f32 %v27, 0.16666667
    %v30 = vmul.f32 %v28, 0.16666667
    %v31 = vmul.f32 %v21, %v29
    %v32 = vmul.f32 %v22, %v30
    %33 = vst [vmem:[#allocation5] sm:$0xff] %v31
    %34 = vst [vmem:[#allocation5 + $0x8] sm:$0xff] %v32
    // Predicated region
    $region10: #{tpu_custom_call.1} parent=1 // pred_check
      _
    $region11: #{tpu_custom_call.1} parent=1 // pred_check_branch
      %36 = sbr.rel (0) target = $region13
    $region12: #{tpu_custom_call.1} parent=1 // pred_region
      %s38 = ssub.s32 256, 256
      %39 = vsyncadd [#allocation4], %s38
      %s41 = sshll.u32 [#allocation5], 4
      %s42 = int_to_ptr.vmem [resolvable:$true] %s41
      %44 = dma.vmem_to_hbm [thread:$0]  %s42, 256, %s1, [#allocation4]
    $region13: #{tpu_custom_call.1} parent=1 // pred_fallthru
      _
    // Predicated region
    $region14: #{tpu_custom_call.1} parent=1 // pred_check
      _
    $region15: #{tpu_custom_call.1} parent=1 // pred_check_branch
      %46 = sbr.rel (0) target = $region17
    $region16: #{tpu_custom_call.1} parent=1 // pred_region
      %47 = dma.done [#allocation4], 256
    $region17: #{tpu_custom_call.1} parent=1 // pred_fallthru
      _
    %48 = vsyncpa [#allocation3], 1
    %49 = vsyncpa [#allocation4], 1

</llo_original>
